<compile_context>
chip_gen: v7x
topology: tpu7x:2x2x1
jax: 0.10.0
libtpu: 0.0.40
codegen_flags: <defaults>
</compile_context>

<pallas_src>
import functools

import jax
import jax.numpy as jnp
from jax.experimental import pallas as pl
from jax.experimental.pallas import tpu as pltpu

LANE = 128          # TPU lane width (last dim)
DEFAULT_TILE_M = 256
MIB = 1024 * 1024


def _round_up(x, m):
    return ((x + m - 1) // m) * m


def _pad2(x, rows, cols):
    r, c = x.shape
    return jnp.pad(x, ((0, rows - r), (0, cols - c)))


def _agg_first(d_in_pad, d_out_pad):
    """Matmul association: dominant MXU term is N^2 * min(d_in, d_out)."""
    return d_in_pad <= d_out_pad


def _prefer_split_dots():
    """v5e's MXU is only 128 deep: the K=2*d_in concat fusion buys nothing there,
    while the lane-axis concatenate costs an extra bf16 copy on its single vst slot."""
    try:
        kind = jax.devices()[0].device_kind.lower()
    except Exception:
        return False
    return ("v5 lite" in kind) or ("v5e" in kind) or ("v5lite" in kind)


def _bspec(shape, index_map, buffers=None):
    """BlockSpec with optional pipeline depth; falls back cleanly if the installed
    jax does not accept pipeline_mode/Buffered."""
    if buffers is not None:
        try:
            return pl.BlockSpec(shape, index_map,
                                pipeline_mode=pl.Buffered(buffers))
        except Exception:
            pass
    return pl.BlockSpec(shape, index_map)


# ----------------------------------------------------------------------------
# Kernel 1: whole encoder fused in a single (grid-less) pallas_call.
# Everything (A, 1/deg, h, all weights) is VMEM-resident across layers.
# ----------------------------------------------------------------------------
def _fused_encoder_kernel(*refs, layer_meta, negative_slope, fuse_k):
    """refs = (a, inv_deg, x, *per-layer params, out).

    Per-layer params: ("agg_first", d_in_pad)  -> (w_cat, b)   w_cat = [W_l ; W_r]
                      ("feat_first", d_in_pad) -> (w_l, w_r, b)
    """
    a = refs[0][...]                      # (Np, Np)  bf16, exact 0/1 edge counts
    inv_deg = refs[1][...]                # (Np, 1)   f32, 1 / max(deg, 1)
    h_bf = refs[2][...]                   # (Np, D0p) bf16 node features
    out_ref = refs[-1]
    param_refs = refs[3:-1]

    h_f32 = None
    p = 0
    for mode, d_in_pad in layer_meta:     # unrolled at trace time (static)
        if mode == "agg_first":
            # mean-aggregate (N^2 * d_in), then the feature matmul(s).
            w_cat_ref, b = param_refs[p], param_refs[p + 1][...]
            p += 2
            agg = (jnp.dot(a, h_bf, preferred_element_type=jnp.float32)
                   * inv_deg).astype(jnp.bfloat16)
            if fuse_k:
                # one K-fused dot: [agg | x] @ [W_l ; W_r]   (v6e/v7x: 256-deep MXU)
                cat = jnp.concatenate([agg, h_bf], axis=1)
                z = jnp.dot(cat, w_cat_ref[...],
                            preferred_element_type=jnp.float32) + b
            else:
                # v5e: two separate 128-deep dots, no concat copy.
                z = (jnp.dot(agg, w_cat_ref[pl.ds(0, d_in_pad), :],
                             preferred_element_type=jnp.float32)
                     + jnp.dot(h_bf, w_cat_ref[pl.ds(d_in_pad, d_in_pad), :],
                               preferred_element_type=jnp.float32) + b)
        else:
            # shrinking layer: project first so the N^2 term runs over d_out:
            #   inv_deg * (A @ (X @ W_l)) + X @ W_r + b
            w_l = param_refs[p][...]
            w_r = param_refs[p + 1][...]
            b = param_refs[p + 2][...]
            p += 3
            xl = jnp.dot(h_bf, w_l, preferred_element_type=jnp.float32)
            xr = jnp.dot(h_bf, w_r, preferred_element_type=jnp.float32)
            agg = jnp.dot(a, xl.astype(jnp.bfloat16),
                          preferred_element_type=jnp.float32) * inv_deg
            z = agg + xr + b
        # f32 epilogue (bias already added); LeakyReLU(negative_slope)
        h_f32 = jnp.where(z > 0, z, negative_slope * z)
        h_bf = h_f32.astype(jnp.bfloat16)

    out_ref[...] = h_f32                  # lane-dense: Dout padded to 128


# ----------------------------------------------------------------------------
# Kernel 2: one SAGEConv layer, row-tiled ('parallel') x K-tiled ('arbitrary').
# A block (tile_m, tile_k), X contraction block (tile_k, d_in), f32 accumulator
# in VMEM scratch; projection + bias + LeakyReLU epilogue at the last K step.
# VMEM use is bounded independently of N (v7x friendly); row axis shards across
# TensorCores on megacore parts.
# ----------------------------------------------------------------------------
def _sage_layer_tiled_kernel(a_ref, xk_ref, inv_deg_ref, x_root_ref,
                             w_cat_ref, b_ref, o_ref, acc_ref,
                             *, negative_slope, d_in_pad, fuse_k):
    k = pl.program_id(1)

    @pl.when(k == 0)
    def _():
        acc_ref[...] = jnp.zeros_like(acc_ref)

    acc_ref[...] += jnp.dot(a_ref[...], xk_ref[...],
                            preferred_element_type=jnp.float32)

    @pl.when(k == pl.num_programs(1) - 1)
    def _():
        agg = (acc_ref[...] * inv_deg_ref[...]).astype(jnp.bfloat16)
        x_root = x_root_ref[...]
        if fuse_k:
            cat = jnp.concatenate([agg, x_root], axis=1)
            z = jnp.dot(cat, w_cat_ref[...], preferred_element_type=jnp.float32)
        else:
            z = (jnp.dot(agg, w_cat_ref[pl.ds(0, d_in_pad), :],
                         preferred_element_type=jnp.float32)
                 + jnp.dot(x_root, w_cat_ref[pl.ds(d_in_pad, d_in_pad), :],
                           preferred_element_type=jnp.float32))
        z = z + b_ref[...]
        o_ref[...] = jnp.where(z > 0, z, negative_slope * z).astype(o_ref.dtype)


def _sage_layer_tiled(a_pad, inv_deg_pad, x_bf, w_cat, b2d, *, negative_slope,
                      tile_m, out_dtype, fuse_k):
    n_pad = a_pad.shape[0]
    d_in_pad = x_bf.shape[1]
    d_out_pad = w_cat.shape[1]
    tile_k = tile_m
    out_itemsize = jnp.dtype(out_dtype).itemsize

    kernel = functools.partial(_sage_layer_tiled_kernel,
                               negative_slope=negative_slope,
                               d_in_pad=d_in_pad, fuse_k=fuse_k)

    flops = 2 * n_pad * n_pad * d_in_pad + 2 * n_pad * (2 * d_in_pad) * d_out_pad
    bytes_accessed = (a_pad.size * 2 + 2 * x_bf.size * 2 + inv_deg_pad.size * 4
                      + w_cat.size * 2 + b2d.size * 4
                      + n_pad * d_out_pad * out_itemsize)
    # VMEM budget: 3x A slab + 2x X-k block + 2x X-root slab + w_cat + bias
    # + 2x out block + f32 accumulator scratch; x2 headroom, capped at 64 MiB.
    block_bytes = (3 * tile_m * tile_k * 2
                   + 2 * tile_k * d_in_pad * 2
                   + 2 * tile_m * d_in_pad * 2
                   + 2 * tile_m * 4
                   + 2 * 2 * d_in_pad * d_out_pad * 2
                   + 2 * d_out_pad * 4
                   + 2 * tile_m * d_out_pad * 4
                   + tile_m * d_in_pad * 4)
    vmem_limit = int(min(64 * MIB, max(16 * MIB, 2 * block_bytes)))

    return pl.pallas_call(
        kernel,
        out_shape=jax.ShapeDtypeStruct((n_pad, d_out_pad), out_dtype),
        grid=(n_pad // tile_m, n_pad // tile_k),
        in_specs=[
            _bspec((tile_m, tile_k), lambda i, k: (i, k), buffers=3),   # A slab
            _bspec((tile_k, d_in_pad), lambda i, k: (k, 0)),            # X (contraction)
            _bspec((tile_m, 1), lambda i, k: (i, 0)),                   # 1/deg rows
            _bspec((tile_m, d_in_pad), lambda i, k: (i, 0)),            # X root rows
            _bspec((2 * d_in_pad, d_out_pad), lambda i, k: (0, 0), buffers=1),
            _bspec((1, d_out_pad), lambda i, k: (0, 0), buffers=1),
        ],
        out_specs=pl.BlockSpec((tile_m, d_out_pad), lambda i, k: (i, 0)),
        scratch_shapes=[pltpu.VMEM((tile_m, d_in_pad), jnp.float32)],
        compiler_params=pltpu.CompilerParams(
            dimension_semantics=("parallel", "arbitrary"),
            vmem_limit_bytes=vmem_limit),
        cost_estimate=pl.CostEstimate(flops=int(flops), transcendentals=0,
                                      bytes_accessed=int(bytes_accessed)),
    )(a_pad, x_bf, inv_deg_pad, x_bf, w_cat, b2d)


# ----------------------------------------------------------------------------
# Glue: parameter init, graph preprocessing, layer packing, forward pass
# ----------------------------------------------------------------------------
def init_encoder_params(key, in_channels, hidden_channels):
    """Deterministic Glorot-uniform init for each SAGEConv (lin_l, lin_r, bias)."""
    params = []
    dims = [in_channels] + list(hidden_channels)
    for i in range(len(hidden_channels)):
        d_in, d_out = dims[i], dims[i + 1]
        key, k1, k2 = jax.random.split(key, 3)
        limit = jnp.sqrt(6.0 / (d_in + d_out))
        # stored as (d_in, d_out) so the kernel computes x @ W (== x @ W_torch.T)
        w_l = jax.random.uniform(k1, (d_in, d_out), jnp.float32, -limit, limit)
        w_r = jax.random.uniform(k2, (d_in, d_out), jnp.float32, -limit, limit)
        b = jnp.zeros((d_out,), jnp.float32)
        params.append((w_l, w_r, b))
    return params


def _build_graph_operands(x, edge_index, n_pad):
    """0/1 count adjacency (exact in bf16) + f32 1/deg, zero-padded node features."""
    n, d_in = x.shape
    src, dst = edge_index[0], edge_index[1]
    counts = jnp.zeros((n, n), jnp.float32).at[dst, src].add(1.0)
    inv_deg = 1.0 / jnp.maximum(counts.sum(axis=1, keepdims=True), 1.0)
    a_pad = _pad2(counts, n_pad, n_pad).astype(jnp.bfloat16)   # small ints: exact in bf16
    inv_deg_pad = _pad2(inv_deg, n_pad, 1)                     # stays f32
    d0_pad = _round_up(d_in, LANE)
    x_pad = _pad2(x, n_pad, d0_pad).astype(jnp.bfloat16)
    return a_pad, inv_deg_pad, x_pad, d0_pad


def encoder_forward(x, edge_index, params, negative_slope=0.5,
                    max_fused_nodes=1024, tile_m=DEFAULT_TILE_M, fuse_k=None):
    """Mirrors Encoder.forward(x, edge_index=edge_index): every SAGEConv layer uses
    the shared full-graph edge_index; dropout is identity (p=0.0 / eval mode).

    Returns (h, target)."""
    # TODO(synk): F.dropout is identity here (module default p=0.0 / eval mode).
    assert len(params) >= 1
    if fuse_k is None:
        fuse_k = not _prefer_split_dots()
    target = x
    n, _ = x.shape
    d_out_final = params[-1][0].shape[1]

    if n <= max_fused_nodes:
        # -------- fully fused path: one pallas_call for all layers --------
        n_pad = _round_up(n, LANE)      # lane-dense A, clean MXU K for A @ X
        a_pad, inv_deg_pad, x_pad, d_prev_pad = _build_graph_operands(
            x, edge_index, n_pad)

        flat_inputs = [a_pad, inv_deg_pad, x_pad]
        layer_meta = []
        flops = 0
        max_dpad = d_prev_pad
        for (w_l, w_r, b) in params:
            d_out = w_l.shape[1]
            d_out_pad = _round_up(d_out, LANE)
            max_dpad = max(max_dpad, d_out_pad)
            wl_p = _pad2(w_l, d_prev_pad, d_out_pad)
            wr_p = _pad2(w_r, d_prev_pad, d_out_pad)
            b_p = jnp.pad(b, (0, d_out_pad - d_out)).reshape(1, d_out_pad)  # f32
            if _agg_first(d_prev_pad, d_out_pad):
                layer_meta.append(("agg_first", d_prev_pad))
                w_cat = jnp.concatenate([wl_p, wr_p], axis=0).astype(jnp.bfloat16)
                flat_inputs += [w_cat, b_p]
                flops += (2 * n_pad * n_pad * d_prev_pad
                          + 2 * n_pad * (2 * d_prev_pad) * d_out_pad)
            else:
                layer_meta.append(("feat_first", d_prev_pad))
                flat_inputs += [wl_p.astype(jnp.bfloat16),
                                wr_p.astype(jnp.bfloat16), b_p]
                flops += (4 * n_pad * d_prev_pad * d_out_pad
                          + 2 * n_pad * n_pad * d_out_pad)
            d_prev_pad = d_out_pad

        in_bytes = sum(int(a.size) * a.dtype.itemsize for a in flat_inputs)
        out_bytes = n_pad * d_prev_pad * 4
        inter_bytes = 4 * n_pad * max_dpad * 4      # agg/cat/z/h class temporaries
        vmem_limit = int(min(64 * MIB,
                             max(32 * MIB, 2 * (in_bytes + out_bytes + inter_bytes))))

        kernel = functools.partial(_fused_encoder_kernel,
                                   layer_meta=tuple(layer_meta),
                                   negative_slope=negative_slope,
                                   fuse_k=fuse_k)
        vmem_spec = pl.BlockSpec(memory_space=pltpu.MemorySpace.VMEM)
        h_pad = pl.pallas_call(
            kernel,
            out_shape=jax.ShapeDtypeStruct((n_pad, d_prev_pad), jnp.float32),
            in_specs=[vmem_spec] * len(flat_inputs),
            out_specs=vmem_spec,
            compiler_params=pltpu.CompilerParams(vmem_limit_bytes=vmem_limit),
            cost_estimate=pl.CostEstimate(flops=int(flops), transcendentals=0,
                                          bytes_accessed=int(in_bytes + out_bytes)),
        )(*flat_inputs)
    else:
        # -------- large-graph path: per-layer, row-tiled x K-tiled grid --------
        tile_m = max(LANE, _round_up(tile_m, LANE))
        n_pad = _round_up(n, tile_m)
        a_pad, inv_deg_pad, h_bf, d_prev_pad = _build_graph_operands(
            x, edge_index, n_pad)
        n_layers = len(params)
        h_pad = None
        for li, (w_l, w_r, b) in enumerate(params):
            d_out = w_l.shape[1]
            d_out_pad = _round_up(d_out, LANE)
            w_cat = jnp.concatenate(
                [_pad2(w_l, d_prev_pad, d_out_pad),
                 _pad2(w_r, d_prev_pad, d_out_pad)], axis=0).astype(jnp.bfloat16)
            b_p = jnp.pad(b, (0, d_out_pad - d_out)).reshape(1, d_out_pad)
            is_last = li == n_layers - 1
            # intermediate layers write bf16 directly (half the HBM writeback,
            # no wrapper-side re-read + cast); only the final layer writes f32.
            out_dtype = jnp.float32 if is_last else jnp.bfloat16
            h_pad = _sage_layer_tiled(a_pad, inv_deg_pad, h_bf, w_cat, b_p,
                                      negative_slope=negative_slope,
                                      tile_m=tile_m, out_dtype=out_dtype,
                                      fuse_k=fuse_k)
            if not is_last:
                h_bf = h_pad
            d_prev_pad = d_out_pad

    return h_pad[:n, :d_out_final], target


# ----------------------------------------------------------------------------
# Pure-JAX references for correctness checks
# ----------------------------------------------------------------------------
def encoder_reference_f32(x, edge_index, params, negative_slope=0.5):
    """Module's exact f32 math."""
    n = x.shape[0]
    src, dst = edge_index[0], edge_index[1]
    a = jnp.zeros((n, n), jnp.float32).at[dst, src].add(1.0)
    a_norm = a / jnp.maximum(a.sum(axis=1, keepdims=True), 1.0)
    h = x
    for (w_l, w_r, b) in params:
        z = (a_norm @ h) @ w_l + h @ w_r + b
        h = jnp.where(z > 0, z, negative_slope * z)
    return h, x


def encoder_reference_bf16(x, edge_index, params, negative_slope=0.5,
                           force_agg_first=False):
    """Reproduces the kernel's bf16-operand / f32-accumulate math (same per-layer
    association), for a tight numerical check."""
    n, d_in = x.shape
    src, dst = edge_index[0], edge_index[1]
    a = jnp.zeros((n, n), jnp.float32).at[dst, src].add(1.0)
    inv_deg = 1.0 / jnp.maximum(a.sum(axis=1, keepdims=True), 1.0)
    a_bf = a.astype(jnp.bfloat16)
    h_bf = x.astype(jnp.bfloat16)
    d_prev_pad = _round_up(d_in, LANE)
    h = h_bf.astype(jnp.float32)
    for (w_l, w_r, b) in params:
        d_out_pad = _round_up(w_l.shape[1], LANE)
        wl_bf = w_l.astype(jnp.bfloat16)
        wr_bf = w_r.astype(jnp.bfloat16)
        if force_agg_first or _agg_first(d_prev_pad, d_out_pad):
            agg = jnp.dot(a_bf, h_bf, preferred_element_type=jnp.float32) * inv_deg
            cat = jnp.concatenate([agg.astype(jnp.bfloat16), h_bf], axis=1)
            w_cat = jnp.concatenate([wl_bf, wr_bf], axis=0)
            z = jnp.dot(cat, w_cat, preferred_element_type=jnp.float32) + b
        else:
            xl = jnp.dot(h_bf, wl_bf, preferred_element_type=jnp.float32)
            xr = jnp.dot(h_bf, wr_bf, preferred_element_type=jnp.float32)
            agg = jnp.dot(a_bf, xl.astype(jnp.bfloat16),
                          preferred_element_type=jnp.float32) * inv_deg
            z = agg + xr + b
        h = jnp.where(z > 0, z, negative_slope * z)
        h_bf = h.astype(jnp.bfloat16)
        d_prev_pad = d_out_pad
    return h, x


if __name__ == "__main__":
    root_key = jax.random.PRNGKey(0)

    def make_graph(key, n, e, in_ch):
        k_x, k_s, k_d = jax.random.split(key, 3)
        x = jax.random.normal(k_x, (n, in_ch), jnp.float32)
        src = jax.random.randint(k_s, (e,), 0, n)
        dst = jax.random.randint(k_d, (e,), 0, n)
        return x, jnp.stack([src, dst], axis=0)     # messages src -> dst

    # Tolerances: the kernel uses bf16 MXU operands, so agreement with pure-f32 math
    # is ~1%; the *exact* check is vs the bf16-emulating reference.
    TIGHT = dict(atol=1e-3, rtol=1e-3)
    LOOSE = dict(atol=5e-2, rtol=5e-2)

    # --- primary config (small shapes implied by the module) -> fused kernel ---
    k_g, k_p, root_key = jax.random.split(root_key, 3)
    N, E, IN, HIDDEN = 16, 48, 8, [32, 16]
    x, edge_index = make_graph(k_g, N, E, IN)
    params = init_encoder_params(k_p, IN, HIDDEN)

    h, target = encoder_forward(x, edge_index, params, negative_slope=0.5)
    h = jax.block_until_ready(h)
    target = jax.block_until_ready(target)

    h_f32, t_ref = encoder_reference_f32(x, edge_index, params, 0.5)
    h_b16, _ = encoder_reference_bf16(x, edge_index, params, 0.5)
    assert h.shape == (N, HIDDEN[-1]) and target.shape == (N, IN)
    assert jnp.array_equal(target, t_ref)
    assert jnp.allclose(h, h_b16, **TIGHT)
    assert jnp.allclose(h, h_f32, **LOOSE)

    # same config via the split-dot (v5e-style) branch
    h_s, _ = encoder_forward(x, edge_index, params, negative_slope=0.5, fuse_k=False)
    h_s = jax.block_until_ready(h_s)
    assert jnp.allclose(h_s, h_b16, **TIGHT)

    # --- exercises project-first ordering + row padding (still fused path) ---
    k_g, k_p, root_key = jax.random.split(root_key, 3)
    N2, E2, IN2, HIDDEN2 = 20, 64, 8, [160, 64]
    x2, ei2 = make_graph(k_g, N2, E2, IN2)
    params2 = init_encoder_params(k_p, IN2, HIDDEN2)
    h2, _ = encoder_forward(x2, ei2, params2, negative_slope=0.5)
    h2 = jax.block_until_ready(h2)
    h2_b16, _ = encoder_reference_bf16(x2, ei2, params2, 0.5)
    h2_f32, _ = encoder_reference_f32(x2, ei2, params2, 0.5)
    assert h2.shape == (N2, HIDDEN2[-1])
    assert jnp.allclose(h2, h2_b16, **TIGHT)
    assert jnp.allclose(h2, h2_f32, **LOOSE)

    # --- large-graph path: row-parallel x K-tiled grid, bf16 intermediates ---
    k_g, k_p, root_key = jax.random.split(root_key, 3)
    N3, E3, IN3, HIDDEN3 = 512, 4096, 8, [256, 64]
    x3, ei3 = make_graph(k_g, N3, E3, IN3)
    params3 = init_encoder_params(k_p, IN3, HIDDEN3)
    h3, _ = encoder_forward(x3, ei3, params3, negative_slope=0.5,
                            max_fused_nodes=64, tile_m=256)
    h3 = jax.block_until_ready(h3)
    h3_b16, _ = encoder_reference_bf16(x3, ei3, params3, 0.5, force_agg_first=True)
    h3_f32, _ = encoder_reference_f32(x3, ei3, params3, 0.5)
    assert h3.shape == (N3, HIDDEN3[-1])
    assert jnp.allclose(h3, h3_b16, **TIGHT)
    assert jnp.allclose(h3, h3_f32, **LOOSE)

    print("KERNEL_OK")
</pallas_src>

<mosaic_0001>
module attributes {stable_mosaic.version = 11 : i64} {
  func.func @_fused_encoder_kernel(%arg0: memref<128x128xbf16, #tpu.memory_space<vmem>>, %arg1: memref<128x1xf32, #tpu.memory_space<vmem>>, %arg2: memref<128x128xbf16, #tpu.memory_space<vmem>>, %arg3: memref<256x128xbf16, #tpu.memory_space<vmem>>, %arg4: memref<1x128xf32, #tpu.memory_space<vmem>>, %arg5: memref<256x128xbf16, #tpu.memory_space<vmem>>, %arg6: memref<1x128xf32, #tpu.memory_space<vmem>>, %arg7: memref<128x128xf32, #tpu.memory_space<vmem>>) attributes {dimension_semantics = [], scalar_prefetch = 0 : i64, scratch_operands = 0 : i64, tpu.core_type = #tpu.core_type<tc>} {
    %c0 = arith.constant 0 : index
    %c0_0 = arith.constant 0 : index
    %0 = vector.load %arg0[%c0, %c0_0] : memref<128x128xbf16, #tpu.memory_space<vmem>>, vector<128x128xbf16>
    %c0_1 = arith.constant 0 : index
    %c0_2 = arith.constant 0 : index
    %1 = vector.load %arg1[%c0_1, %c0_2] : memref<128x1xf32, #tpu.memory_space<vmem>>, vector<128x1xf32>
    %c0_3 = arith.constant 0 : index
    %c0_4 = arith.constant 0 : index
    %2 = vector.load %arg2[%c0_3, %c0_4] : memref<128x128xbf16, #tpu.memory_space<vmem>>, vector<128x128xbf16>
    %c0_5 = arith.constant 0 : index
    %c0_6 = arith.constant 0 : index
    %3 = vector.load %arg4[%c0_5, %c0_6] : memref<1x128xf32, #tpu.memory_space<vmem>>, vector<1x128xf32>
    %cst = arith.constant dense<0.000000e+00> : vector<128x128xf32>
    %4 = tpu.matmul %0, %2, %cst {dimension_numbers = #tpu.dot_dimension_numbers<[1], [0], [0], [1], [0, 0, 1, 1], [], []>} : vector<128x128xbf16>, vector<128x128xbf16>, vector<128x128xf32> -> vector<128x128xf32>
    %5 = vector.broadcast %1 : vector<128x1xf32> to vector<128x128xf32>
    %6 = arith.mulf %4, %5 : vector<128x128xf32>
    %7 = arith.truncf %6 : vector<128x128xf32> to vector<128x128xbf16>
    %8 = tpu.concatenate %7, %2 in 1 : vector<128x128xbf16>, vector<128x128xbf16> -> vector<128x256xbf16>
    %c0_7 = arith.constant 0 : index
    %c0_8 = arith.constant 0 : index
    %9 = vector.load %arg3[%c0_7, %c0_8] : memref<256x128xbf16, #tpu.memory_space<vmem>>, vector<256x128xbf16>
    %cst_9 = arith.constant dense<0.000000e+00> : vector<128x128xf32>
    %10 = tpu.matmul %8, %9, %cst_9 {dimension_numbers = #tpu.dot_dimension_numbers<[1], [0], [0], [1], [0, 0, 1, 1], [], []>} : vector<128x256xbf16>, vector<256x128xbf16>, vector<128x128xf32> -> vector<128x128xf32>
    %11 = vector.broadcast %3 : vector<1x128xf32> to vector<128x128xf32>
    %12 = arith.addf %10, %11 : vector<128x128xf32>
    %cst_10 = arith.constant 0.000000e+00 : f32
    %13 = vector.broadcast %cst_10 : f32 to vector<128x128xf32>
    %14 = arith.cmpf ogt, %12, %13 : vector<128x128xf32>
    %cst_11 = arith.constant 5.000000e-01 : f32
    %15 = vector.broadcast %cst_11 : f32 to vector<128x128xf32>
    %16 = arith.mulf %15, %12 : vector<128x128xf32>
    %17 = arith.select %14, %12, %16 : vector<128x128xi1>, vector<128x128xf32>
    %18 = arith.truncf %17 : vector<128x128xf32> to vector<128x128xbf16>
    %c0_12 = arith.constant 0 : index
    %c0_13 = arith.constant 0 : index
    %19 = vector.load %arg6[%c0_12, %c0_13] : memref<1x128xf32, #tpu.memory_space<vmem>>, vector<1x128xf32>
    %cst_14 = arith.constant dense<0.000000e+00> : vector<128x128xf32>
    %20 = tpu.matmul %0, %18, %cst_14 {dimension_numbers = #tpu.dot_dimension_numbers<[1], [0], [0], [1], [0, 0, 1, 1], [], []>} : vector<128x128xbf16>, vector<128x128xbf16>, vector<128x128xf32> -> vector<128x128xf32>
    %21 = vector.broadcast %1 : vector<128x1xf32> to vector<128x128xf32>
    %22 = arith.mulf %20, %21 : vector<128x128xf32>
    %23 = arith.truncf %22 : vector<128x128xf32> to vector<128x128xbf16>
    %24 = tpu.concatenate %23, %18 in 1 : vector<128x128xbf16>, vector<128x128xbf16> -> vector<128x256xbf16>
    %c0_15 = arith.constant 0 : index
    %c0_16 = arith.constant 0 : index
    %25 = vector.load %arg5[%c0_15, %c0_16] : memref<256x128xbf16, #tpu.memory_space<vmem>>, vector<256x128xbf16>
    %cst_17 = arith.constant dense<0.000000e+00> : vector<128x128xf32>
    %26 = tpu.matmul %24, %25, %cst_17 {dimension_numbers = #tpu.dot_dimension_numbers<[1], [0], [0], [1], [0, 0, 1, 1], [], []>} : vector<128x256xbf16>, vector<256x128xbf16>, vector<128x128xf32> -> vector<128x128xf32>
    %27 = vector.broadcast %19 : vector<1x128xf32> to vector<128x128xf32>
    %28 = arith.addf %26, %27 : vector<128x128xf32>
    %cst_18 = arith.constant 0.000000e+00 : f32
    %29 = vector.broadcast %cst_18 : f32 to vector<128x128xf32>
    %30 = arith.cmpf ogt, %28, %29 : vector<128x128xf32>
    %cst_19 = arith.constant 5.000000e-01 : f32
    %31 = vector.broadcast %cst_19 : f32 to vector<128x128xf32>
    %32 = arith.mulf %31, %28 : vector<128x128xf32>
    %33 = arith.select %30, %28, %32 : vector<128x128xi1>, vector<128x128xf32>
    %c0_20 = arith.constant 0 : index
    %c0_21 = arith.constant 0 : index
    %34 = vector.load %arg7[%c0_20, %c0_21] : memref<128x128xf32, #tpu.memory_space<vmem>>, vector<128x128xf32>
    tpu.vector_store %arg7[%c0_20, %c0_21], %33 {strides = array<i32>} : memref<128x128xf32, #tpu.memory_space<vmem>>, vector<128x128xf32>,
    return
  }
}

</mosaic_0001>

<llo_original>
// kernel: tpu_custom_call.1
$region0: #{tpu_custom_call.1}
  #allocation0 [shape = 'u32[]', space=smem, size = 0x4, offset = 0x4, fixed_abs, tag = 'smem constant byte address 0x4 - core index']
  #allocation1 [shape = 'u32[144,128]{1,0:T(1,128)}', space=vmem, size = 0x12000, scoped, tag = 'internal scratch']
  %s0 = inlined_call_operand.hbm [shape: bf16[128,128], index: 0, kind: input, shape index: {}]
  %s1 = inlined_call_operand.vmem [shape: f32[128,1], index: 1, kind: input, shape index: {}]
  %s2 = inlined_call_operand.hbm [shape: bf16[128,128], index: 2, kind: input, shape index: {}]
  %s3 = inlined_call_operand.vmem [shape: bf16[256,128], index: 3, kind: input, shape index: {}]
  %s4 = inlined_call_operand.vmem [shape: f32[1,128], index: 4, kind: input, shape index: {}]
  %s5 = inlined_call_operand.hbm [shape: bf16[256,128], index: 5, kind: input, shape index: {}]
  %s6 = inlined_call_operand.vmem [shape: f32[1,128], index: 6, kind: input, shape index: {}]
  %s7 = inlined_call_operand.hbm [shape: f32[128,128], index: 7, kind: output, shape index: {}]
  %s8 = sld [smem:[#allocation0]]
  $region50: #{tpu_custom_call.1} parent=0
    _
  %s10 = ssub.s32 1, %s8
  %s11 = scalar_select 0, %s10, %s8
  $region1: #{tpu_custom_call.1} parent=0
    #allocation2 [shape = 'u8[32768]{0}', space=vmem, size = 0x8000, scoped, tag = 'input window, operand 0, single buffered']
    #allocation3 [shape = 's32[1]{0}', space=sflag, size = 0x4, scoped, tag = 'scoped memory for tpu_custom_call.1']
    #allocation4 [shape = 's32[1]{0}', space=sflag, size = 0x4, scoped, tag = 'scoped memory for tpu_custom_call.1']
    #allocation5 [shape = 'u8[32768]{0}', space=vmem, size = 0x8000, scoped, tag = 'input window, operand 2, single buffered']
    #allocation6 [shape = 's32[1]{0}', space=sflag, size = 0x4, scoped, tag = 'scoped memory for tpu_custom_call.1']
    #allocation7 [shape = 'u8[65536]{0}', space=vmem, size = 0x10000, scoped, tag = 'input window, operand 5, single buffered']
    #allocation8 [shape = 'u8[65536]{0}', space=vmem, size = 0x10000, scoped, tag = 'output window, operand 0, single buffered']
    %12 = vsyncpa [#allocation3], 0
    %13 = vsyncpa [#allocation6], 0
    %14 = vsyncpa [#allocation4], 0
    // Predicated region
    $region2: #{tpu_custom_call.1} parent=1 // pred_check
      _
    $region3: #{tpu_custom_call.1} parent=1 // pred_check_branch
      %16 = sbr.rel (0) target = $region5
    $region4: #{tpu_custom_call.1} parent=1 // pred_region
      %s18 = ssub.s32 1024, 1024
      %19 = vsyncadd [#allocation3], %s18
      %s20 = sshll.u32 [#allocation2], 4
      %s21 = int_to_ptr.vmem [resolvable:$true] %s20
      %26 = dma.hbm_to_vmem [thread:$0]  %s0, 1024, %s21, [#allocation3], 64, 64, 4
    $region5: #{tpu_custom_call.1} parent=1 // pred_fallthru
      _
    // Predicated region
    $region6: #{tpu_custom_call.1} parent=1 // pred_check
      _
    $region7: #{tpu_custom_call.1} parent=1 // pred_check_branch
      %28 = sbr.rel (0) target = $region9
    $region8: #{tpu_custom_call.1} parent=1 // pred_region
      _
    $region9: #{tpu_custom_call.1} parent=1 // pred_fallthru
      _
    // Predicated region
    $region10: #{tpu_custom_call.1} parent=1 // pred_check
      _
    $region11: #{tpu_custom_call.1} parent=1 // pred_check_branch
      %30 = sbr.rel (0) target = $region13
    $region12: #{tpu_custom_call.1} parent=1 // pred_region
      %s32 = ssub.s32 1024, 1024
      %33 = vsyncadd [#allocation6], %s32
      %s34 = sshll.u32 [#allocation5], 4
      %s35 = int_to_ptr.vmem [resolvable:$true] %s34
      %40 = dma.hbm_to_vmem [thread:$0]  %s2, 1024, %s35, [#allocation6], 64, 64, 4
    $region13: #{tpu_custom_call.1} parent=1 // pred_fallthru
      _
    // Predicated region
    $region14: #{tpu_custom_call.1} parent=1 // pred_check
      _
    $region15: #{tpu_custom_call.1} parent=1 // pred_check_branch
      %42 = sbr.rel (0) target = $region17
    $region16: #{tpu_custom_call.1} parent=1 // pred_region
      _
    $region17: #{tpu_custom_call.1} parent=1 // pred_fallthru
      _
    // Predicated region
    $region18: #{tpu_custom_call.1} parent=1 // pred_check
      _
    $region19: #{tpu_custom_call.1} parent=1 // pred_check_branch
      %44 = sbr.rel (0) target = $region21
    $region20: #{tpu_custom_call.1} parent=1 // pred_region
      _
    $region21: #{tpu_custom_call.1} parent=1 // pred_fallthru
      _
    // Predicated region
    $region22: #{tpu_custom_call.1} parent=1 // pred_check
      _
    $region23: #{tpu_custom_call.1} parent=1 // pred_check_branch
      %46 = sbr.rel (0) target = $region25
    $region24: #{tpu_custom_call.1} parent=1 // pred_region
      %s48 = ssub.s32 2048, 2048
      %49 = vsyncadd [#allocation6], %s48
      %s50 = sshll.u32 [#allocation7], 4
      %s51 = int_to_ptr.vmem [resolvable:$true] %s50
      %56 = dma.hbm_to_vmem [thread:$0]  %s5, 2048, %s51, [#allocation6], 64, 64, 4
    $region25: #{tpu_custom_call.1} parent=1 // pred_fallthru
      _
    // Predicated region
    $region26: #{tpu_custom_call.1} parent=1 // pred_check
      _
    $region27: #{tpu_custom_call.1} parent=1 // pred_check_branch
      %58 = sbr.rel (0) target = $region29
    $region28: #{tpu_custom_call.1} parent=1 // pred_region
      _
    $region29: #{tpu_custom_call.1} parent=1 // pred_fallthru
      _
    // Predicated region
    $region30: #{tpu_custom_call.1} parent=1 // pred_check
      _
    $region31: #{tpu_custom_call.1} parent=1 // pred_check_branch
      %60 = sbr.rel (0) target = $region33
    $region32: #{tpu_custom_call.1} parent=1 // pred_region
      %61 = dma.done [#allocation3], 1024
    $region33: #{tpu_custom_call.1} parent=1 // pred_fallthru
      _
    // Predicated region
    $region34: #{tpu_custom_call.1} parent=1 // pred_check
      _
    $region35: #{tpu_custom_call.1} parent=1 // pred_check_branch
      %63 = sbr.rel (0) target = $region37
    $region36: #{tpu_custom_call.1} parent=1 // pred_region
      %64 = dma.done [#allocation6], 1024
    $region37: #{tpu_custom_call.1} parent=1 // pred_fallthru
      _
    // Predicated region
    $region38: #{tpu_custom_call.1} parent=1 // pred_check
      _
    $region39: #{tpu_custom_call.1} parent=1 // pred_check_branch
      %66 = sbr.rel (0) target = $region41
    $region40: #{tpu_custom_call.1} parent=1 // pred_region
      %67 = dma.done [#allocation6], 2048
    $region41: #{tpu_custom_call.1} parent=1 // pred_fallthru
      _
    %v69 = vld [vmem:[#allocation2] sm:$0xf]
    %v70 = vld [vmem:[#allocation2 + $0x4] sm:$0xf]
    %v71 = vld [vmem:[#allocation2 + $0x8] sm:$0xf]
    %v72 = vld [vmem:[#allocation2 + $0xc] sm:$0xf]
    %v73 = vld [vmem:[#allocation2 + $0x10] sm:$0xf]
    %v74 = vld [vmem:[#allocation2 + $0x14] sm:$0xf]
    %v75 = vld [vmem:[#allocation2 + $0x18] sm:$0xf]
    %v76 = vld [vmem:[#allocation2 + $0x1c] sm:$0xf]
    %v77 = vld [vmem:[#allocation2 + $0x20] sm:$0xf]
    %v78 = vld [vmem:[#allocation2 + $0x24] sm:$0xf]
    %v79 = vld [vmem:[#allocation2 + $0x28] sm:$0xf]
    %v80 = vld [vmem:[#allocation2 + $0x2c] sm:$0xf]
    %v81 = vld [vmem:[#allocation2 + $0x30] sm:$0xf]
    %v82 = vld [vmem:[#allocation2 + $0x34] sm:$0xf]
    %v83 = vld [vmem:[#allocation2 + $0x38] sm:$0xf]
    %v84 = vld [vmem:[#allocation2 + $0x3c] sm:$0xf]
    %v85 = vld [vmem:[%s1] sm:$0xff]
    %v86 = vld [vmem:[%s1 + $0x8] sm:$0xff]
    %v87 = vld [vmem:[%s1 + $0x10] sm:$0xff]
    %v88 = vld [vmem:[%s1 + $0x18] sm:$0xff]
    %v89 = vld [vmem:[%s1 + $0x20] sm:$0xff]
    %v90 = vld [vmem:[%s1 + $0x28] sm:$0xff]
    %v91 = vld [vmem:[%s1 + $0x30] sm:$0xff]
    %v92 = vld [vmem:[%s1 + $0x38] sm:$0xff]
    %v93 = vld [vmem:[%s1 + $0x40] sm:$0xff]
    %v94 = vld [vmem:[%s1 + $0x48] sm:$0xff]
    %v95 = vld [vmem:[%s1 + $0x50] sm:$0xff]
    %v96 = vld [vmem:[%s1 + $0x58] sm:$0xff]
    %v97 = vld [vmem:[%s1 + $0x60] sm:$0xff]
    %v98 = vld [vmem:[%s1 + $0x68] sm:$0xff]
    %v99 = vld [vmem:[%s1 + $0x70] sm:$0xff]
    %v100 = vld [vmem:[%s1 + $0x78] sm:$0xff]
    %v101 = vld [vmem:[#allocation5] sm:$0xf]
    %v102 = vld [vmem:[#allocation5 + $0x4] sm:$0xf]
    %v103 = vld [vmem:[#allocation5 + $0x8] sm:$0xf]
    %v104 = vld [vmem:[#allocation5 + $0xc] sm:$0xf]
    %v105 = vld [vmem:[#allocation5 + $0x10] sm:$0xf]
    %v106 = vld [vmem:[#allocation5 + $0x14] sm:$0xf]
    %v107 = vld [vmem:[#allocation5 + $0x18] sm:$0xf]
    %v108 = vld [vmem:[#allocation5 + $0x1c] sm:$0xf]
    %v109 = vld [vmem:[#allocation5 + $0x20] sm:$0xf]
    %v110 = vld [vmem:[#allocation5 + $0x24] sm:$0xf]
    %v111 = vld [vmem:[#allocation5 + $0x28] sm:$0xf]
    %v112 = vld [vmem:[#allocation5 + $0x2c] sm:$0xf]
    %v113 = vld [vmem:[#allocation5 + $0x30] sm:$0xf]
    %v114 = vld [vmem:[#allocation5 + $0x34] sm:$0xf]
    %v115 = vld [vmem:[#allocation5 + $0x38] sm:$0xf]
    %v116 = vld [vmem:[#allocation5 + $0x3c] sm:$0xf]
    %v117 = vld [vmem:[%s4] sm:$0x1]
    %v134 = vunpack.c.l.b16 %v69
    %v135 = vunpack.c.l.b16 %v70
    %v136 = vunpack.c.l.b16 %v71
    %v137 = vunpack.c.l.b16 %v72
    %v138 = vunpack.c.l.b16 %v73
    %v139 = vunpack.c.l.b16 %v74
    %v140 = vunpack.c.l.b16 %v75
    %v141 = vunpack.c.l.b16 %v76
    %v142 = vunpack.c.l.b16 %v77
    %v143 = vunpack.c.l.b16 %v78
    %v144 = vunpack.c.l.b16 %v79
    %v145 = vunpack.c.l.b16 %v80
    %v146 = vunpack.c.l.b16 %v81
    %v147 = vunpack.c.l.b16 %v82
    %v148 = vunpack.c.l.b16 %v83
    %v149 = vunpack.c.l.b16 %v84
    %v150 = vpack.c.b16 %v135, %v134
    %v151 = vpack.c.b16 %v137, %v136
    %v152 = vpack.c.b16 %v139, %v138
    %v153 = vpack.c.b16 %v141, %v140
    %v154 = vpack.c.b16 %v143, %v142
    %v155 = vpack.c.b16 %v145, %v144
    %v156 = vpack.c.b16 %v147, %v146
    %v157 = vpack.c.b16 %v149, %v148
    %v182 = vunpack.c.l.b16 %v101
    %v183 = vunpack.c.l.b16 %v102
    %v184 = vunpack.c.l.b16 %v103
    %v185 = vunpack.c.l.b16 %v104
    %v186 = vunpack.c.l.b16 %v105
    %v187 = vunpack.c.l.b16 %v106
    %v188 = vunpack.c.l.b16 %v107
    %v189 = vunpack.c.l.b16 %v108
    %v190 = vunpack.c.l.b16 %v109
    %v191 = vunpack.c.l.b16 %v110
    %v192 = vunpack.c.l.b16 %v111
    %v193 = vunpack.c.l.b16 %v112
    %v194 = vunpack.c.l.b16 %v113
    %v195 = vunpack.c.l.b16 %v114
    %v196 = vunpack.c.l.b16 %v115
    %v197 = vunpack.c.l.b16 %v116
    %v198 = vpack.c.b16 %v183, %v182
    %v199 = vpack.c.b16 %v185, %v184
    %v200 = vpack.c.b16 %v187, %v186
    %v201 = vpack.c.b16 %v189, %v188
    %v202 = vpack.c.b16 %v191, %v190
    %v203 = vpack.c.b16 %v193, %v192
    %v204 = vpack.c.b16 %v195, %v194
    %v205 = vpack.c.b16 %v197, %v196
    %214 = vmatprep.subr.bf16.mxu0 0
    %215 = vmatpush1.bf16.msra.mxu0 %v198
    %216 = vmatprep.subr.bf16.mxu0 0
    %217 = vmatpush1.bf16.msra.mxu0 %v199
    %218 = vmatprep.subr.bf16.mxu0 0
    %219 = vmatpush1.bf16.msra.mxu0 %v200
    %220 = vmatprep.subr.bf16.mxu0 0
    %221 = vmatpush1.bf16.msra.mxu0 %v201
    %222 = vmatprep.subr.bf16.mxu0 0
    %223 = vmatpush1.bf16.msra.mxu0 %v202
    %224 = vmatprep.subr.bf16.mxu0 0
    %225 = vmatpush1.bf16.msra.mxu0 %v203
    %226 = vmatprep.subr.bf16.mxu0 0
    %227 = vmatpush1.bf16.msra.mxu0 %v204
    %228 = vmatprep.subr.bf16.mxu0 0
    %229 = vmatpush1.bf16.msra.mxu0 %v205
    %230 = vmatprep.subr.bf16.mxu0 0
    %231 = vmatpush1.bf16.msra.mxu0 0
    %232 = vmatprep.subr.bf16.mxu0 0
    %233 = vmatpush1.bf16.msra.mxu0 0
    %234 = vmatprep.subr.bf16.mxu0 0
    %235 = vmatpush1.bf16.msra.mxu0 0
    %236 = vmatprep.subr.bf16.mxu0 0
    %237 = vmatpush1.bf16.msra.mxu0 0
    %238 = vmatprep.subr.bf16.mxu0 0
    %239 = vmatpush1.bf16.msra.mxu0 0
    %240 = vmatprep.subr.bf16.mxu0 0
    %241 = vmatpush1.bf16.msra.mxu0 0
    %242 = vmatprep.subr.bf16.mxu0 0
    %243 = vmatpush1.bf16.msra.mxu0 0
    %244 = vmatprep.subr.bf16.mxu0 0
    %245 = vmatpush1.bf16.msra.mxu0 0
    %246 = vmatprep.mubr.bf16.mxu0 0
    %247 = vmatmul.mubr.bf16.gmra.mrb[0].mxu0 %v150
    %v248 = vpop.f32.mrb[0].mxu0
    %v249 = vadd.f32 0.0, %v248
    %v250 = vpop.f32.mrb[0].mxu0
    %v251 = vpop.f32.mrb[0].mxu0
    %v252 = vadd.f32 0.0, %v251
    %v253 = vpop.f32.mrb[0].mxu0
    %254 = vmatprep.mubr.bf16.mxu0 0
    %255 = vmatmul.mubr.bf16.gmra.mrb[0].mxu0 %v151
    %v256 = vpop.f32.mrb[0].mxu0
    %v257 = vadd.f32 0.0, %v256
    %v258 = vpop.f32.mrb[0].mxu0
    %v259 = vpop.f32.mrb[0].mxu0
    %v260 = vadd.f32 0.0, %v259
    %v261 = vpop.f32.mrb[0].mxu0
    %262 = vmatprep.mubr.bf16.mxu0 0
    %263 = vmatmul.mubr.bf16.gmra.mrb[0].mxu0 %v152
    %v264 = vpop.f32.mrb[0].mxu0
    %v265 = vadd.f32 0.0, %v264
    %v266 = vpop.f32.mrb[0].mxu0
    %v267 = vpop.f32.mrb[0].mxu0
    %v268 = vadd.f32 0.0, %v267
    %v269 = vpop.f32.mrb[0].mxu0
    %270 = vmatprep.mubr.bf16.mxu0 0
    %271 = vmatmul.mubr.bf16.gmra.mrb[0].mxu0 %v153
    %v272 = vpop.f32.mrb[0].mxu0
    %v273 = vadd.f32 0.0, %v272
    %v274 = vpop.f32.mrb[0].mxu0
    %v275 = vpop.f32.mrb[0].mxu0
    %v276 = vadd.f32 0.0, %v275
    %v277 = vpop.f32.mrb[0].mxu0
    %278 = vmatprep.mubr.bf16.mxu0 0
    %279 = vmatmul.mubr.bf16.gmra.mrb[0].mxu0 %v154
    %v280 = vpop.f32.mrb[0].mxu0
    %v281 = vadd.f32 0.0, %v280
    %v282 = vpop.f32.mrb[0].mxu0
    %v283 = vpop.f32.mrb[0].mxu0
    %v284 = vadd.f32 0.0, %v283
    %v285 = vpop.f32.mrb[0].mxu0
    %286 = vmatprep.mubr.bf16.mxu0 0
    %287 = vmatmul.mubr.bf16.gmra.mrb[0].mxu0 %v155
    %v288 = vpop.f32.mrb[0].mxu0
    %v289 = vadd.f32 0.0, %v288
    %v290 = vpop.f32.mrb[0].mxu0
    %v291 = vpop.f32.mrb[0].mxu0
    %v292 = vadd.f32 0.0, %v291
    %v293 = vpop.f32.mrb[0].mxu0
    %294 = vmatprep.mubr.bf16.mxu0 0
    %295 = vmatmul.mubr.bf16.gmra.mrb[0].mxu0 %v156
    %v296 = vpop.f32.mrb[0].mxu0
    %v297 = vadd.f32 0.0, %v296
    %v298 = vpop.f32.mrb[0].mxu0
    %v299 = vpop.f32.mrb[0].mxu0
    %v300 = vadd.f32 0.0, %v299
    %v301 = vpop.f32.mrb[0].mxu0
    %302 = vmatprep.mubr.bf16.mxu0 0
    %303 = vmatmul.mubr.bf16.gmra.mrb[0].mxu0 %v157
    %v304 = vpop.f32.mrb[0].mxu0
    %v305 = vadd.f32 0.0, %v304
    %v306 = vpop.f32.mrb[0].mxu0
    %v307 = vpop.f32.mrb[0].mxu0
    %v308 = vadd.f32 0.0, %v307
    %v309 = vpop.f32.mrb[0].mxu0
    %310 = vdwg.mxu0
    %312 = vset.pattern.permute.xlu0 0
    %313 = vperm.xlu0 %312, %v85
    %v314 = vpop.permute.xlu0 %313
    %317 = vset.pattern.permute.xlu0 0
    %318 = vperm.xlu0 %317, %v86
    %v319 = vpop.permute.xlu0 %318
    %322 = vset.pattern.permute.xlu0 0
    %323 = vperm.xlu0 %322, %v87
    %v324 = vpop.permute.xlu0 %323
    %327 = vset.pattern.permute.xlu0 0
    %328 = vperm.xlu0 %327, %v88
    %v329 = vpop.permute.xlu0 %328
    %332 = vset.pattern.permute.xlu0 0
    %333 = vperm.xlu0 %332, %v89
    %v334 = vpop.permute.xlu0 %333
    %337 = vset.pattern.permute.xlu0 0
    %338 = vperm.xlu0 %337, %v90
    %v339 = vpop.permute.xlu0 %338
    %342 = vset.pattern.permute.xlu0 0
    %343 = vperm.xlu0 %342, %v91
    %v344 = vpop.permute.xlu0 %343
    %347 = vset.pattern.permute.xlu0 0
    %348 = vperm.xlu0 %347, %v92
    %v349 = vpop.permute.xlu0 %348
    %352 = vset.pattern.permute.xlu0 0
    %353 = vperm.xlu0 %352, %v93
    %v354 = vpop.permute.xlu0 %353
    %357 = vset.pattern.permute.xlu0 0
    %358 = vperm.xlu0 %357, %v94
    %v359 = vpop.permute.xlu0 %358
    %362 = vset.pattern.permute.xlu0 0
    %363 = vperm.xlu0 %362, %v95
    %v364 = vpop.permute.xlu0 %363
    %367 = vset.pattern.permute.xlu0 0
    %368 = vperm.xlu0 %367, %v96
    %v369 = vpop.permute.xlu0 %368
    %372 = vset.pattern.permute.xlu0 0
    %373 = vperm.xlu0 %372, %v97
    %v374 = vpop.permute.xlu0 %373
    %377 = vset.pattern.permute.xlu0 0
    %378 = vperm.xlu0 %377, %v98
    %v379 = vpop.permute.xlu0 %378
    %382 = vset.pattern.permute.xlu0 0
    %383 = vperm.xlu0 %382, %v99
    %v384 = vpop.permute.xlu0 %383
    %387 = vset.pattern.permute.xlu0 0
    %388 = vperm.xlu0 %387, %v100
    %v389 = vpop.permute.xlu0 %388
    %v391 = vmul.f32 %v249, %v314
    %v392 = vmul.f32 %v252, %v319
    %v393 = vmul.f32 %v257, %v324
    %v394 = vmul.f32 %v260, %v329
    %v395 = vmul.f32 %v265, %v334
    %v396 = vmul.f32 %v268, %v339
    %v397 = vmul.f32 %v273, %v344
    %v398 = vmul.f32 %v276, %v349
    %v399 = vmul.f32 %v281, %v354
    %v400 = vmul.f32 %v284, %v359
    %v401 = vmul.f32 %v289, %v364
    %v402 = vmul.f32 %v292, %v369
    %v403 = vmul.f32 %v297, %v374
    %v404 = vmul.f32 %v300, %v379
    %v405 = vmul.f32 %v305, %v384
    %v406 = vmul.f32 %v308, %v389
    %v407 = vpack.c.bf16 %v392, %v391
    %v408 = vpack.c.bf16 %v394, %v393
    %v409 = vpack.c.bf16 %v396, %v395
    %v410 = vpack.c.bf16 %v398, %v397
    %v411 = vpack.c.bf16 %v400, %v399
    %v412 = vpack.c.bf16 %v402, %v401
    %v413 = vpack.c.bf16 %v404, %v403
    %v414 = vpack.c.bf16 %v406, %v405
    %v415 = vld [vmem:[%s3] sm:$0xf]
    %v416 = vld [vmem:[%s3 + $0x4] sm:$0xf]
    %v417 = vld [vmem:[%s3 + $0x8] sm:$0xf]
    %v418 = vld [vmem:[%s3 + $0xc] sm:$0xf]
    %v419 = vld [vmem:[%s3 + $0x10] sm:$0xf]
    %v420 = vld [vmem:[%s3 + $0x14] sm:$0xf]
    %v421 = vld [vmem:[%s3 + $0x18] sm:$0xf]
    %v422 = vld [vmem:[%s3 + $0x1c] sm:$0xf]
    %v423 = vld [vmem:[%s3 + $0x20] sm:$0xf]
    %v424 = vld [vmem:[%s3 + $0x24] sm:$0xf]
    %v425 = vld [vmem:[%s3 + $0x28] sm:$0xf]
    %v426 = vld [vmem:[%s3 + $0x2c] sm:$0xf]
    %v427 = vld [vmem:[%s3 + $0x30] sm:$0xf]
    %v428 = vld [vmem:[%s3 + $0x34] sm:$0xf]
    %v429 = vld [vmem:[%s3 + $0x38] sm:$0xf]
    %v430 = vld [vmem:[%s3 + $0x3c] sm:$0xf]
    %v431 = vld [vmem:[%s3 + $0x40] sm:$0xf]
    %v432 = vld [vmem:[%s3 + $0x44] sm:$0xf]
    %v433 = vld [vmem:[%s3 + $0x48] sm:$0xf]
    %v434 = vld [vmem:[%s3 + $0x4c] sm:$0xf]
    %v435 = vld [vmem:[%s3 + $0x50] sm:$0xf]
    %v436 = vld [vmem:[%s3 + $0x54] sm:$0xf]
    %v437 = vld [vmem:[%s3 + $0x58] sm:$0xf]
    %v438 = vld [vmem:[%s3 + $0x5c] sm:$0xf]
    %v439 = vld [vmem:[%s3 + $0x60] sm:$0xf]
    %v440 = vld [vmem:[%s3 + $0x64] sm:$0xf]
    %v441 = vld [vmem:[%s3 + $0x68] sm:$0xf]
    %v442 = vld [vmem:[%s3 + $0x6c] sm:$0xf]
    %v443 = vld [vmem:[%s3 + $0x70] sm:$0xf]
    %v444 = vld [vmem:[%s3 + $0x74] sm:$0xf]
    %v445 = vld [vmem:[%s3 + $0x78] sm:$0xf]
    %v446 = vld [vmem:[%s3 + $0x7c] sm:$0xf]
    %v448 = vlaneseq
    %v449 = vshrl.u32 %v448, 7
    %v450 = vsub.s32 0, %v449
    %v451 = vrot.slane %v117, %v450
    %v485 = vunpack.c.l.b16 %v415
    %v486 = vunpack.c.l.b16 %v416
    %v487 = vunpack.c.l.b16 %v417
    %v488 = vunpack.c.l.b16 %v418
    %v489 = vunpack.c.l.b16 %v419
    %v490 = vunpack.c.l.b16 %v420
    %v491 = vunpack.c.l.b16 %v421
    %v492 = vunpack.c.l.b16 %v422
    %v493 = vunpack.c.l.b16 %v423
    %v494 = vunpack.c.l.b16 %v424
    %v495 = vunpack.c.l.b16 %v425
    %v496 = vunpack.c.l.b16 %v426
    %v497 = vunpack.c.l.b16 %v427
    %v498 = vunpack.c.l.b16 %v428
    %v499 = vunpack.c.l.b16 %v429
    %v500 = vunpack.c.l.b16 %v430
    %v501 = vunpack.c.l.b16 %v431
    %v502 = vunpack.c.l.b16 %v432
    %v503 = vunpack.c.l.b16 %v433
    %v504 = vunpack.c.l.b16 %v434
    %v505 = vunpack.c.l.b16 %v435
    %v506 = vunpack.c.l.b16 %v436
    %v507 = vunpack.c.l.b16 %v437
    %v508 = vunpack.c.l.b16 %v438
    %v509 = vunpack.c.l.b16 %v439
    %v510 = vunpack.c.l.b16 %v440
    %v511 = vunpack.c.l.b16 %v441
    %v512 = vunpack.c.l.b16 %v442
    %v513 = vunpack.c.l.b16 %v443
    %v514 = vunpack.c.l.b16 %v444
    %v515 = vunpack.c.l.b16 %v445
    %v516 = vunpack.c.l.b16 %v446
    %v517 = vpack.c.b16 %v486, %v485
    %v518 = vpack.c.b16 %v488, %v487
    %v519 = vpack.c.b16 %v490, %v489
    %v520 = vpack.c.b16 %v492, %v491
    %v521 = vpack.c.b16 %v494, %v493
    %v522 = vpack.c.b16 %v496, %v495
    %v523 = vpack.c.b16 %v498, %v497
    %v524 = vpack.c.b16 %v500, %v499
    %v525 = vpack.c.b16 %v502, %v501
    %v526 = vpack.c.b16 %v504, %v503
    %v527 = vpack.c.b16 %v506, %v505
    %v528 = vpack.c.b16 %v508, %v507
    %v529 = vpack.c.b16 %v510, %v509
    %v530 = vpack.c.b16 %v512, %v511
    %v531 = vpack.c.b16 %v514, %v513
    %v532 = vpack.c.b16 %v516, %v515
    %549 = vmatprep.subr.bf16.mxu0 0
    %550 = vmatpush1.bf16.msra.mxu0 %v517
    %551 = vmatprep.subr.bf16.mxu0 0
    %552 = vmatpush1.bf16.msra.mxu0 %v518
    %553 = vmatprep.subr.bf16.mxu0 0
    %554 = vmatpush1.bf16.msra.mxu0 %v519
    %555 = vmatprep.subr.bf16.mxu0 0
    %556 = vmatpush1.bf16.msra.mxu0 %v520
    %557 = vmatprep.subr.bf16.mxu0 0
    %558 = vmatpush1.bf16.msra.mxu0 %v521
    %559 = vmatprep.subr.bf16.mxu0 0
    %560 = vmatpush1.bf16.msra.mxu0 %v522
    %561 = vmatprep.subr.bf16.mxu0 0
    %562 = vmatpush1.bf16.msra.mxu0 %v523
    %563 = vmatprep.subr.bf16.mxu0 0
    %564 = vmatpush1.bf16.msra.mxu0 %v524
    %565 = vmatprep.subr.bf16.mxu0 0
    %566 = vmatpush1.bf16.msra.mxu0 %v525
    %567 = vmatprep.subr.bf16.mxu0 0
    %568 = vmatpush1.bf16.msra.mxu0 %v526
    %569 = vmatprep.subr.bf16.mxu0 0
    %570 = vmatpush1.bf16.msra.mxu0 %v527
    %571 = vmatprep.subr.bf16.mxu0 0
    %572 = vmatpush1.bf16.msra.mxu0 %v528
    %573 = vmatprep.subr.bf16.mxu0 0
    %574 = vmatpush1.bf16.msra.mxu0 %v529
    %575 = vmatprep.subr.bf16.mxu0 0
    %576 = vmatpush1.bf16.msra.mxu0 %v530
    %577 = vmatprep.subr.bf16.mxu0 0
    %578 = vmatpush1.bf16.msra.mxu0 %v531
    %579 = vmatprep.subr.bf16.mxu0 0
    %580 = vmatpush1.bf16.msra.mxu0 %v532
    %581 = vmatprep.mubr.bf16.mxu0 %v198
    %582 = vmatmul.mubr.bf16.gmra.mrb[0].mxu0 %v407
    %v583 = vpop.f32.mrb[0].mxu0
    %v584 = vadd.f32 %v451, %v583
    %v585 = vpop.f32.mrb[0].mxu0
    %v586 = vpop.f32.mrb[0].mxu0
    %v587 = vadd.f32 %v451, %v586
    %v588 = vpop.f32.mrb[0].mxu0
    %589 = vmatprep.mubr.bf16.mxu0 %v199
    %590 = vmatmul.mubr.bf16.gmra.mrb[0].mxu0 %v408
    %v591 = vpop.f32.mrb[0].mxu0
    %v592 = vadd.f32 %v451, %v591
    %v593 = vpop.f32.mrb[0].mxu0
    %v594 = vpop.f32.mrb[0].mxu0
    %v595 = vadd.f32 %v451, %v594
    %v596 = vpop.f32.mrb[0].mxu0
    %597 = vmatprep.mubr.bf16.mxu0 %v200
    %598 = vmatmul.mubr.bf16.gmra.mrb[0].mxu0 %v409
    %v599 = vpop.f32.mrb[0].mxu0
    %v600 = vadd.f32 %v451, %v599
    %v601 = vpop.f32.mrb[0].mxu0
    %v602 = vpop.f32.mrb[0].mxu0
    %v603 = vadd.f32 %v451, %v602
    %v604 = vpop.f32.mrb[0].mxu0
    %605 = vmatprep.mubr.bf16.mxu0 %v201
    %606 = vmatmul.mubr.bf16.gmra.mrb[0].mxu0 %v410
    %v607 = vpop.f32.mrb[0].mxu0
    %v608 = vadd.f32 %v451, %v607
    %v609 = vpop.f32.mrb[0].mxu0
    %v610 = vpop.f32.mrb[0].mxu0
    %v611 = vadd.f32 %v451, %v610
    %v612 = vpop.f32.mrb[0].mxu0
    %613 = vmatprep.mubr.bf16.mxu0 %v202
    %614 = vmatmul.mubr.bf16.gmra.mrb[0].mxu0 %v411
    %v615 = vpop.f32.mrb[0].mxu0
    %v616 = vadd.f32 %v451, %v615
    %v617 = vpop.f32.mrb[0].mxu0
    %v618 = vpop.f32.mrb[0].mxu0
    %v619 = vadd.f32 %v451, %v618
    %v620 = vpop.f32.mrb[0].mxu0
    %621 = vmatprep.mubr.bf16.mxu0 %v203
    %622 = vmatmul.mubr.bf16.gmra.mrb[0].mxu0 %v412
    %v623 = vpop.f32.mrb[0].mxu0
    %v624 = vadd.f32 %v451, %v623
    %v625 = vpop.f32.mrb[0].mxu0
    %v626 = vpop.f32.mrb[0].mxu0
    %v627 = vadd.f32 %v451, %v626
    %v628 = vpop.f32.mrb[0].mxu0
    %629 = vmatprep.mubr.bf16.mxu0 %v204
    %630 = vmatmul.mubr.bf16.gmra.mrb[0].mxu0 %v413
    %v631 = vpop.f32.mrb[0].mxu0
    %v632 = vadd.f32 %v451, %v631
    %v633 = vpop.f32.mrb[0].mxu0
    %v634 = vpop.f32.mrb[0].mxu0
    %v635 = vadd.f32 %v451, %v634
    %v636 = vpop.f32.mrb[0].mxu0
    %637 = vmatprep.mubr.bf16.mxu0 %v205
    %638 = vmatmul.mubr.bf16.gmra.mrb[0].mxu0 %v414
    %v639 = vpop.f32.mrb[0].mxu0
    %v640 = vadd.f32 %v451, %v639
    %v641 = vpop.f32.mrb[0].mxu0
    %v642 = vpop.f32.mrb[0].mxu0
    %v643 = vadd.f32 %v451, %v642
    %v644 = vpop.f32.mrb[0].mxu0
    %645 = vdwg.mxu0
    %vm646 = vcmp.gt.f32.partialorder %v584, 0.0
    %vm647 = vcmp.gt.f32.partialorder %v587, 0.0
    %vm648 = vcmp.gt.f32.partialorder %v592, 0.0
    %vm649 = vcmp.gt.f32.partialorder %v595, 0.0
    %vm650 = vcmp.gt.f32.partialorder %v600, 0.0
    %vm651 = vcmp.gt.f32.partialorder %v603, 0.0
    %vm652 = vcmp.gt.f32.partialorder %v608, 0.0
    %vm653 = vcmp.gt.f32.partialorder %v611, 0.0
    %vm654 = vcmp.gt.f32.partialorder %v616, 0.0
    %vm655 = vcmp.gt.f32.partialorder %v619, 0.0
    %vm656 = vcmp.gt.f32.partialorder %v624, 0.0
    %vm657 = vcmp.gt.f32.partialorder %v627, 0.0
    %vm658 = vcmp.gt.f32.partialorder %v632, 0.0
    %vm659 = vcmp.gt.f32.partialorder %v635, 0.0
    %vm660 = vcmp.gt.f32.partialorder %v640, 0.0
    %vm661 = vcmp.gt.f32.partialorder %v643, 0.0
    %v662 = vmul.f32 %v584, 0.5
    %v663 = vmul.f32 %v587, 0.5
    %v664 = vmul.f32 %v592, 0.5
    %v665 = vmul.f32 %v595, 0.5
    %v666 = vmul.f32 %v600, 0.5
    %v667 = vmul.f32 %v603, 0.5
    %v668 = vmul.f32 %v608, 0.5
    %v669 = vmul.f32 %v611, 0.5
    %v670 = vmul.f32 %v616, 0.5
    %v671 = vmul.f32 %v619, 0.5
    %v672 = vmul.f32 %v624, 0.5
    %v673 = vmul.f32 %v627, 0.5
    %v674 = vmul.f32 %v632, 0.5
    %v675 = vmul.f32 %v635, 0.5
    %v676 = vmul.f32 %v640, 0.5
    %v677 = vmul.f32 %v643, 0.5
    %v678 = vsel %vm646, %v584, %v662
    %v679 = vsel %vm647, %v587, %v663
    %v680 = vsel %vm648, %v592, %v664
    %v681 = vsel %vm649, %v595, %v665
    %v682 = vsel %vm650, %v600, %v666
    %v683 = vsel %vm651, %v603, %v667
    %v684 = vsel %vm652, %v608, %v668
    %v685 = vsel %vm653, %v611, %v669
    %v686 = vsel %vm654, %v616, %v670
    %v687 = vsel %vm655, %v619, %v671
    %v688 = vsel %vm656, %v624, %v672
    %v689 = vsel %vm657, %v627, %v673
    %v690 = vsel %vm658, %v632, %v674
    %v691 = vsel %vm659, %v635, %v675
    %v692 = vsel %vm660, %v640, %v676
    %v693 = vsel %vm661, %v643, %v677
    %v694 = vpack.c.bf16 %v679, %v678
    %v695 = vpack.c.bf16 %v681, %v680
    %v696 = vpack.c.bf16 %v683, %v682
    %v697 = vpack.c.bf16 %v685, %v684
    %v698 = vpack.c.bf16 %v687, %v686
    %v699 = vpack.c.bf16 %v689, %v688
    %v700 = vpack.c.bf16 %v691, %v690
    %v701 = vpack.c.bf16 %v693, %v692
    %v702 = vld [vmem:[%s6] sm:$0x1]
    %703 = vmatprep.subr.bf16.mxu0 0
    %704 = vmatpush1.bf16.msra.mxu0 %v694
    %705 = vmatprep.subr.bf16.mxu0 0
    %706 = vmatpush1.bf16.msra.mxu0 %v695
    %707 = vmatprep.subr.bf16.mxu0 0
    %708 = vmatpush1.bf16.msra.mxu0 %v696
    %709 = vmatprep.subr.bf16.mxu0 0
    %710 = vmatpush1.bf16.msra.mxu0 %v697
    %711 = vmatprep.subr.bf16.mxu0 0
    %712 = vmatpush1.bf16.msra.mxu0 %v698
    %713 = vmatprep.subr.bf16.mxu0 0
    %714 = vmatpush1.bf16.msra.mxu0 %v699
    %715 = vmatprep.subr.bf16.mxu0 0
    %716 = vmatpush1.bf16.msra.mxu0 %v700
    %717 = vmatprep.subr.bf16.mxu0 0
    %718 = vmatpush1.bf16.msra.mxu0 %v701
    %719 = vmatprep.subr.bf16.mxu0 0
    %720 = vmatpush1.bf16.msra.mxu0 0
    %721 = vmatprep.subr.bf16.mxu0 0
    %722 = vmatpush1.bf16.msra.mxu0 0
    %723 = vmatprep.subr.bf16.mxu0 0
    %724 = vmatpush1.bf16.msra.mxu0 0
    %725 = vmatprep.subr.bf16.mxu0 0
    %726 = vmatpush1.bf16.msra.mxu0 0
    %727 = vmatprep.subr.bf16.mxu0 0
    %728 = vmatpush1.bf16.msra.mxu0 0
    %729 = vmatprep.subr.bf16.mxu0 0
    %730 = vmatpush1.bf16.msra.mxu0 0
    %731 = vmatprep.subr.bf16.mxu0 0
    %732 = vmatpush1.bf16.msra.mxu0 0
    %733 = vmatprep.subr.bf16.mxu0 0
    %734 = vmatpush1.bf16.msra.mxu0 0
    %735 = vmatprep.mubr.bf16.mxu0 0
    %736 = vmatmul.mubr.bf16.gmra.mrb[0].mxu0 %v150
    %v737 = vpop.f32.mrb[0].mxu0
    %v738 = vadd.f32 0.0, %v737
    %v739 = vpop.f32.mrb[0].mxu0
    %v740 = vpop.f32.mrb[0].mxu0
    %v741 = vadd.f32 0.0, %v740
    %v742 = vpop.f32.mrb[0].mxu0
    %743 = vmatprep.mubr.bf16.mxu0 0
    %744 = vmatmul.mubr.bf16.gmra.mrb[0].mxu0 %v151
    %v745 = vpop.f32.mrb[0].mxu0
    %v746 = vadd.f32 0.0, %v745
    %v747 = vpop.f32.mrb[0].mxu0
    %v748 = vpop.f32.mrb[0].mxu0
    %v749 = vadd.f32 0.0, %v748
    %v750 = vpop.f32.mrb[0].mxu0
    %751 = vmatprep.mubr.bf16.mxu0 0
    %752 = vmatmul.mubr.bf16.gmra.mrb[0].mxu0 %v152
    %v753 = vpop.f32.mrb[0].mxu0
    %v754 = vadd.f32 0.0, %v753
    %v755 = vpop.f32.mrb[0].mxu0
    %v756 = vpop.f32.mrb[0].mxu0
    %v757 = vadd.f32 0.0, %v756
    %v758 = vpop.f32.mrb[0].mxu0
    %759 = vmatprep.mubr.bf16.mxu0 0
    %760 = vmatmul.mubr.bf16.gmra.mrb[0].mxu0 %v153
    %v761 = vpop.f32.mrb[0].mxu0
    %v762 = vadd.f32 0.0, %v761
    %v763 = vpop.f32.mrb[0].mxu0
    %v764 = vpop.f32.mrb[0].mxu0
    %v765 = vadd.f32 0.0, %v764
    %v766 = vpop.f32.mrb[0].mxu0
    %767 = vmatprep.mubr.bf16.mxu0 0
    %768 = vmatmul.mubr.bf16.gmra.mrb[0].mxu0 %v154
    %v769 = vpop.f32.mrb[0].mxu0
    %v770 = vadd.f32 0.0, %v769
    %v771 = vpop.f32.mrb[0].mxu0
    %v772 = vpop.f32.mrb[0].mxu0
    %v773 = vadd.f32 0.0, %v772
    %v774 = vpop.f32.mrb[0].mxu0
    %775 = vmatprep.mubr.bf16.mxu0 0
    %776 = vmatmul.mubr.bf16.gmra.mrb[0].mxu0 %v155
    %v777 = vpop.f32.mrb[0].mxu0
    %v778 = vadd.f32 0.0, %v777
    %v779 = vpop.f32.mrb[0].mxu0
    %v780 = vpop.f32.mrb[0].mxu0
    %v781 = vadd.f32 0.0, %v780
    %v782 = vpop.f32.mrb[0].mxu0
    %783 = vmatprep.mubr.bf16.mxu0 0
    %784 = vmatmul.mubr.bf16.gmra.mrb[0].mxu0 %v156
    %v785 = vpop.f32.mrb[0].mxu0
    %v786 = vadd.f32 0.0, %v785
    %v787 = vpop.f32.mrb[0].mxu0
    %v788 = vpop.f32.mrb[0].mxu0
    %v789 = vadd.f32 0.0, %v788
    %v790 = vpop.f32.mrb[0].mxu0
    %791 = vmatprep.mubr.bf16.mxu0 0
    %792 = vmatmul.mubr.bf16.gmra.mrb[0].mxu0 %v157
    %v793 = vpop.f32.mrb[0].mxu0
    %v794 = vadd.f32 0.0, %v793
    %v795 = vpop.f32.mrb[0].mxu0
    %v796 = vpop.f32.mrb[0].mxu0
    %v797 = vadd.f32 0.0, %v796
    %v798 = vpop.f32.mrb[0].mxu0
    %799 = vdwg.mxu0
    %v800 = vmul.f32 %v738, %v314
    %v801 = vmul.f32 %v741, %v319
    %v802 = vmul.f32 %v746, %v324
    %v803 = vmul.f32 %v749, %v329
    %v804 = vmul.f32 %v754, %v334
    %v805 = vmul.f32 %v757, %v339
    %v806 = vmul.f32 %v762, %v344
    %v807 = vmul.f32 %v765, %v349
    %v808 = vmul.f32 %v770, %v354
    %v809 = vmul.f32 %v773, %v359
    %v810 = vmul.f32 %v778, %v364
    %v811 = vmul.f32 %v781, %v369
    %v812 = vmul.f32 %v786, %v374
    %v813 = vmul.f32 %v789, %v379
    %v814 = vmul.f32 %v794, %v384
    %v815 = vmul.f32 %v797, %v389
    %v816 = vpack.c.bf16 %v801, %v800
    %v817 = vpack.c.bf16 %v803, %v802
    %v818 = vpack.c.bf16 %v805, %v804
    %v819 = vpack.c.bf16 %v807, %v806
    %v820 = vpack.c.bf16 %v809, %v808
    %v821 = vpack.c.bf16 %v811, %v810
    %v822 = vpack.c.bf16 %v813, %v812
    %v823 = vpack.c.bf16 %v815, %v814
    %v824 = vld [vmem:[#allocation7] sm:$0xf]
    %v825 = vld [vmem:[#allocation7 + $0x4] sm:$0xf]
    %v826 = vld [vmem:[#allocation7 + $0x8] sm:$0xf]
    %v827 = vld [vmem:[#allocation7 + $0xc] sm:$0xf]
    %v828 = vld [vmem:[#allocation7 + $0x10] sm:$0xf]
    %v829 = vld [vmem:[#allocation7 + $0x14] sm:$0xf]
    %v830 = vld [vmem:[#allocation7 + $0x18] sm:$0xf]
    %v831 = vld [vmem:[#allocation7 + $0x1c] sm:$0xf]
    %v832 = vld [vmem:[#allocation7 + $0x20] sm:$0xf]
    %v833 = vld [vmem:[#allocation7 + $0x24] sm:$0xf]
    %v834 = vld [vmem:[#allocation7 + $0x28] sm:$0xf]
    %v835 = vld [vmem:[#allocation7 + $0x2c] sm:$0xf]
    %v836 = vld [vmem:[#allocation7 + $0x30] sm:$0xf]
    %v837 = vld [vmem:[#allocation7 + $0x34] sm:$0xf]
    %v838 = vld [vmem:[#allocation7 + $0x38] sm:$0xf]
    %v839 = vld [vmem:[#allocation7 + $0x3c] sm:$0xf]
    %v840 = vld [vmem:[#allocation7 + $0x40] sm:$0xf]
    %v841 = vld [vmem:[#allocation7 + $0x44] sm:$0xf]
    %v842 = vld [vmem:[#allocation7 + $0x48] sm:$0xf]
    %v843 = vld [vmem:[#allocation7 + $0x4c] sm:$0xf]
    %v844 = vld [vmem:[#allocation7 + $0x50] sm:$0xf]
    %v845 = vld [vmem:[#allocation7 + $0x54] sm:$0xf]
    %v846 = vld [vmem:[#allocation7 + $0x58] sm:$0xf]
    %v847 = vld [vmem:[#allocation7 + $0x5c] sm:$0xf]
    %v848 = vld [vmem:[#allocation7 + $0x60] sm:$0xf]
    %v849 = vld [vmem:[#allocation7 + $0x64] sm:$0xf]
    %v850 = vld [vmem:[#allocation7 + $0x68] sm:$0xf]
    %v851 = vld [vmem:[#allocation7 + $0x6c] sm:$0xf]
    %v852 = vld [vmem:[#allocation7 + $0x70] sm:$0xf]
    %v853 = vld [vmem:[#allocation7 + $0x74] sm:$0xf]
    %v854 = vld [vmem:[#allocation7 + $0x78] sm:$0xf]
    %v855 = vld [vmem:[#allocation7 + $0x7c] sm:$0xf]
    %v857 = vlaneseq
    %v858 = vshrl.u32 %v857, 7
    %v859 = vsub.s32 0, %v858
    %v860 = vrot.slane %v702, %v859
    %v894 = vunpack.c.l.b16 %v824
    %v895 = vunpack.c.l.b16 %v825
    %v896 = vunpack.c.l.b16 %v826
    %v897 = vunpack.c.l.b16 %v827
    %v898 = vunpack.c.l.b16 %v828
    %v899 = vunpack.c.l.b16 %v829
    %v900 = vunpack.c.l.b16 %v830
    %v901 = vunpack.c.l.b16 %v831
    %v902 = vunpack.c.l.b16 %v832
    %v903 = vunpack.c.l.b16 %v833
    %v904 = vunpack.c.l.b16 %v834
    %v905 = vunpack.c.l.b16 %v835
    %v906 = vunpack.c.l.b16 %v836
    %v907 = vunpack.c.l.b16 %v837
    %v908 = vunpack.c.l.b16 %v838
    %v909 = vunpack.c.l.b16 %v839
    %v910 = vunpack.c.l.b16 %v840
    %v911 = vunpack.c.l.b16 %v841
    %v912 = vunpack.c.l.b16 %v842
    %v913 = vunpack.c.l.b16 %v843
    %v914 = vunpack.c.l.b16 %v844
    %v915 = vunpack.c.l.b16 %v845
    %v916 = vunpack.c.l.b16 %v846
    %v917 = vunpack.c.l.b16 %v847
    %v918 = vunpack.c.l.b16 %v848
    %v919 = vunpack.c.l.b16 %v849
    %v920 = vunpack.c.l.b16 %v850
    %v921 = vunpack.c.l.b16 %v851
    %v922 = vunpack.c.l.b16 %v852
    %v923 = vunpack.c.l.b16 %v853
    %v924 = vunpack.c.l.b16 %v854
    %v925 = vunpack.c.l.b16 %v855
    %v926 = vpack.c.b16 %v895, %v894
    %v927 = vpack.c.b16 %v897, %v896
    %v928 = vpack.c.b16 %v899, %v898
    %v929 = vpack.c.b16 %v901, %v900
    %v930 = vpack.c.b16 %v903, %v902
    %v931 = vpack.c.b16 %v905, %v904
    %v932 = vpack.c.b16 %v907, %v906
    %v933 = vpack.c.b16 %v909, %v908
    %v934 = vpack.c.b16 %v911, %v910
    %v935 = vpack.c.b16 %v913, %v912
    %v936 = vpack.c.b16 %v915, %v914
    %v937 = vpack.c.b16 %v917, %v916
    %v938 = vpack.c.b16 %v919, %v918
    %v939 = vpack.c.b16 %v921, %v920
    %v940 = vpack.c.b16 %v923, %v922
    %v941 = vpack.c.b16 %v925, %v924
    %958 = vmatprep.subr.bf16.mxu0 0
    %959 = vmatpush1.bf16.msra.mxu0 %v926
    %960 = vmatprep.subr.bf16.mxu0 0
    %961 = vmatpush1.bf16.msra.mxu0 %v927
    %962 = vmatprep.subr.bf16.mxu0 0
    %963 = vmatpush1.bf16.msra.mxu0 %v928
    %964 = vmatprep.subr.bf16.mxu0 0
    %965 = vmatpush1.bf16.msra.mxu0 %v929
    %966 = vmatprep.subr.bf16.mxu0 0
    %967 = vmatpush1.bf16.msra.mxu0 %v930
    %968 = vmatprep.subr.bf16.mxu0 0
    %969 = vmatpush1.bf16.msra.mxu0 %v931
    %970 = vmatprep.subr.bf16.mxu0 0
    %971 = vmatpush1.bf16.msra.mxu0 %v932
    %972 = vmatprep.subr.bf16.mxu0 0
    %973 = vmatpush1.bf16.msra.mxu0 %v933
    %974 = vmatprep.subr.bf16.mxu0 0
    %975 = vmatpush1.bf16.msra.mxu0 %v934
    %976 = vmatprep.subr.bf16.mxu0 0
    %977 = vmatpush1.bf16.msra.mxu0 %v935
    %978 = vmatprep.subr.bf16.mxu0 0
    %979 = vmatpush1.bf16.msra.mxu0 %v936
    %980 = vmatprep.subr.bf16.mxu0 0
    %981 = vmatpush1.bf16.msra.mxu0 %v937
    %982 = vmatprep.subr.bf16.mxu0 0
    %983 = vmatpush1.bf16.msra.mxu0 %v938
    %984 = vmatprep.subr.bf16.mxu0 0
    %985 = vmatpush1.bf16.msra.mxu0 %v939
    %986 = vmatprep.subr.bf16.mxu0 0
    %987 = vmatpush1.bf16.msra.mxu0 %v940
    %988 = vmatprep.subr.bf16.mxu0 0
    %989 = vmatpush1.bf16.msra.mxu0 %v941
    %990 = vmatprep.mubr.bf16.mxu0 %v694
    %991 = vmatmul.mubr.bf16.gmra.mrb[0].mxu0 %v816
    %v992 = vpop.f32.mrb[0].mxu0
    %v993 = vadd.f32 %v860, %v992
    %v994 = vpop.f32.mrb[0].mxu0
    %v995 = vpop.f32.mrb[0].mxu0
    %v996 = vadd.f32 %v860, %v995
    %v997 = vpop.f32.mrb[0].mxu0
    %998 = vmatprep.mubr.bf16.mxu0 %v695
    %999 = vmatmul.mubr.bf16.gmra.mrb[0].mxu0 %v817
    %v1000 = vpop.f32.mrb[0].mxu0
    %v1001 = vadd.f32 %v860, %v1000
    %v1002 = vpop.f32.mrb[0].mxu0
    %v1003 = vpop.f32.mrb[0].mxu0
    %v1004 = vadd.f32 %v860, %v1003
    %v1005 = vpop.f32.mrb[0].mxu0
    %1006 = vmatprep.mubr.bf16.mxu0 %v696
    %1007 = vmatmul.mubr.bf16.gmra.mrb[0].mxu0 %v818
    %v1008 = vpop.f32.mrb[0].mxu0
    %v1009 = vadd.f32 %v860, %v1008
    %v1010 = vpop.f32.mrb[0].mxu0
    %v1011 = vpop.f32.mrb[0].mxu0
    %v1012 = vadd.f32 %v860, %v1011
    %v1013 = vpop.f32.mrb[0].mxu0
    %1014 = vmatprep.mubr.bf16.mxu0 %v697
    %1015 = vmatmul.mubr.bf16.gmra.mrb[0].mxu0 %v819
    %v1016 = vpop.f32.mrb[0].mxu0
    %v1017 = vadd.f32 %v860, %v1016
    %v1018 = vpop.f32.mrb[0].mxu0
    %v1019 = vpop.f32.mrb[0].mxu0
    %v1020 = vadd.f32 %v860, %v1019
    %v1021 = vpop.f32.mrb[0].mxu0
    %1022 = vmatprep.mubr.bf16.mxu0 %v698
    %1023 = vmatmul.mubr.bf16.gmra.mrb[0].mxu0 %v820
    %v1024 = vpop.f32.mrb[0].mxu0
    %v1025 = vadd.f32 %v860, %v1024
    %v1026 = vpop.f32.mrb[0].mxu0
    %v1027 = vpop.f32.mrb[0].mxu0
    %v1028 = vadd.f32 %v860, %v1027
    %v1029 = vpop.f32.mrb[0].mxu0
    %1030 = vmatprep.mubr.bf16.mxu0 %v699
    %1031 = vmatmul.mubr.bf16.gmra.mrb[0].mxu0 %v821
    %v1032 = vpop.f32.mrb[0].mxu0
    %v1033 = vadd.f32 %v860, %v1032
    %v1034 = vpop.f32.mrb[0].mxu0
    %v1035 = vpop.f32.mrb[0].mxu0
    %v1036 = vadd.f32 %v860, %v1035
    %v1037 = vpop.f32.mrb[0].mxu0
    %1038 = vmatprep.mubr.bf16.mxu0 %v700
    %1039 = vmatmul.mubr.bf16.gmra.mrb[0].mxu0 %v822
    %v1040 = vpop.f32.mrb[0].mxu0
    %v1041 = vadd.f32 %v860, %v1040
    %v1042 = vpop.f32.mrb[0].mxu0
    %v1043 = vpop.f32.mrb[0].mxu0
    %v1044 = vadd.f32 %v860, %v1043
    %v1045 = vpop.f32.mrb[0].mxu0
    %1046 = vmatprep.mubr.bf16.mxu0 %v701
    %1047 = vmatmul.mubr.bf16.gmra.mrb[0].mxu0 %v823
    %v1048 = vpop.f32.mrb[0].mxu0
    %v1049 = vadd.f32 %v860, %v1048
    %v1050 = vpop.f32.mrb[0].mxu0
    %v1051 = vpop.f32.mrb[0].mxu0
    %v1052 = vadd.f32 %v860, %v1051
    %v1053 = vpop.f32.mrb[0].mxu0
    %1054 = vdwg.mxu0
    %vm1055 = vcmp.gt.f32.partialorder %v993, 0.0
    %vm1056 = vcmp.gt.f32.partialorder %v996, 0.0
    %vm1057 = vcmp.gt.f32.partialorder %v1001, 0.0
    %vm1058 = vcmp.gt.f32.partialorder %v1004, 0.0
    %vm1059 = vcmp.gt.f32.partialorder %v1009, 0.0
    %vm1060 = vcmp.gt.f32.partialorder %v1012, 0.0
    %vm1061 = vcmp.gt.f32.partialorder %v1017, 0.0
    %vm1062 = vcmp.gt.f32.partialorder %v1020, 0.0
    %vm1063 = vcmp.gt.f32.partialorder %v1025, 0.0
    %vm1064 = vcmp.gt.f32.partialorder %v1028, 0.0
    %vm1065 = vcmp.gt.f32.partialorder %v1033, 0.0
    %vm1066 = vcmp.gt.f32.partialorder %v1036, 0.0
    %vm1067 = vcmp.gt.f32.partialorder %v1041, 0.0
    %vm1068 = vcmp.gt.f32.partialorder %v1044, 0.0
    %vm1069 = vcmp.gt.f32.partialorder %v1049, 0.0
    %vm1070 = vcmp.gt.f32.partialorder %v1052, 0.0
    %v1071 = vmul.f32 %v993, 0.5
    %v1072 = vmul.f32 %v996, 0.5
    %v1073 = vmul.f32 %v1001, 0.5
    %v1074 = vmul.f32 %v1004, 0.5
    %v1075 = vmul.f32 %v1009, 0.5
    %v1076 = vmul.f32 %v1012, 0.5
    %v1077 = vmul.f32 %v1017, 0.5
    %v1078 = vmul.f32 %v1020, 0.5
    %v1079 = vmul.f32 %v1025, 0.5
    %v1080 = vmul.f32 %v1028, 0.5
    %v1081 = vmul.f32 %v1033, 0.5
    %v1082 = vmul.f32 %v1036, 0.5
    %v1083 = vmul.f32 %v1041, 0.5
    %v1084 = vmul.f32 %v1044, 0.5
    %v1085 = vmul.f32 %v1049, 0.5
    %v1086 = vmul.f32 %v1052, 0.5
    %v1087 = vsel %vm1055, %v993, %v1071
    %v1088 = vsel %vm1056, %v996, %v1072
    %v1089 = vsel %vm1057, %v1001, %v1073
    %v1090 = vsel %vm1058, %v1004, %v1074
    %v1091 = vsel %vm1059, %v1009, %v1075
    %v1092 = vsel %vm1060, %v1012, %v1076
    %v1093 = vsel %vm1061, %v1017, %v1077
    %v1094 = vsel %vm1062, %v1020, %v1078
    %v1095 = vsel %vm1063, %v1025, %v1079
    %v1096 = vsel %vm1064, %v1028, %v1080
    %v1097 = vsel %vm1065, %v1033, %v1081
    %v1098 = vsel %vm1066, %v1036, %v1082
    %v1099 = vsel %vm1067, %v1041, %v1083
    %v1100 = vsel %vm1068, %v1044, %v1084
    %v1101 = vsel %vm1069, %v1049, %v1085
    %v1102 = vsel %vm1070, %v1052, %v1086
    %1103 = vst [vmem:[#allocation8] sm:$0xff] %v1087
    %1104 = vst [vmem:[#allocation8 + $0x8] sm:$0xff] %v1088
    %1105 = vst [vmem:[#allocation8 + $0x10] sm:$0xff] %v1089
    %1106 = vst [vmem:[#allocation8 + $0x18] sm:$0xff] %v1090
    %1107 = vst [vmem:[#allocation8 + $0x20] sm:$0xff] %v1091
    %1108 = vst [vmem:[#allocation8 + $0x28] sm:$0xff] %v1092
    %1109 = vst [vmem:[#allocation8 + $0x30] sm:$0xff] %v1093
    %1110 = vst [vmem:[#allocation8 + $0x38] sm:$0xff] %v1094
    %1111 = vst [vmem:[#allocation8 + $0x40] sm:$0xff] %v1095
    %1112 = vst [vmem:[#allocation8 + $0x48] sm:$0xff] %v1096
    %1113 = vst [vmem:[#allocation8 + $0x50] sm:$0xff] %v1097
    %1114 = vst [vmem:[#allocation8 + $0x58] sm:$0xff] %v1098
    %1115 = vst [vmem:[#allocation8 + $0x60] sm:$0xff] %v1099
    %1116 = vst [vmem:[#allocation8 + $0x68] sm:$0xff] %v1100
    %1117 = vst [vmem:[#allocation8 + $0x70] sm:$0xff] %v1101
    %1118 = vst [vmem:[#allocation8 + $0x78] sm:$0xff] %v1102
    // Predicated region
    $region42: #{tpu_custom_call.1} parent=1 // pred_check
      _
    $region43: #{tpu_custom_call.1} parent=1 // pred_check_branch
      %1120 = sbr.rel (0) target = $region45
    $region44: #{tpu_custom_call.1} parent=1 // pred_region
      %s1122 = ssub.s32 2048, 2048
      %1123 = vsyncadd [#allocation4], %s1122
      %s1124 = sshll.u32 [#allocation8], 4
      %s1125 = int_to_ptr.vmem [resolvable:$true] %s1124
      %1130 = dma.vmem_to_hbm [thread:$0]  %s1125, 2048, %s7, [#allocation4], 128, 128, 8
    $region45: #{tpu_custom_call.1} parent=1 // pred_fallthru
      _
    // Predicated region
    $region46: #{tpu_custom_call.1} parent=1 // pred_check
      _
    $region47: #{tpu_custom_call.1} parent=1 // pred_check_branch
      %1132 = sbr.rel (0) target = $region49
    $region48: #{tpu_custom_call.1} parent=1 // pred_region
      %1133 = dma.done [#allocation4], 2048
    $region49: #{tpu_custom_call.1} parent=1 // pred_fallthru
      _
    %1134 = vsyncpa [#allocation3], 1
    %1135 = vsyncpa [#allocation6], 1
    %1136 = vsyncpa [#allocation4], 1

</llo_original>
